<compile_context>
chip_gen: v7x
topology: tpu7x:2x2x1
jax: 0.10.0
libtpu: 0.0.40
codegen_flags: <defaults>
</compile_context>

<pallas_src>
import functools
import math

import jax
import jax.numpy as jnp
from jax import lax
from jax.experimental import pallas as pl
from jax.experimental.pallas import tpu as pltpu

_HALF_PI = math.pi / 2.0
_INV_2PI = 0.15915494309189535
# 3-term Cody-Waite split of 2*pi (8x the cephes pi/4 split).  n * _2PI_P1 is
# exact in f32 for n <= 2^15, i.e. valid for |angle| up to ~2e5 rad.
_2PI_P1 = 6.28125
_2PI_P2 = 1.93500518798828125e-3
_2PI_P3 = 3.019915981956753e-7


def _sinusoidal_kernel(time_ref, freq_ref, out_ref, *, dim, half_dim, k, width):
    # time_ref : (TB, k)      f32  -- k timesteps packed per output row
    # freq_ref : (1, width)   f32  -- freqs[col % half_dim], tiled k lane-groups
    # out_ref  : (TB, width)       -- width = k * dim (lane-dense when dim < 128)
    col = lax.broadcasted_iota(jnp.int32, (1, width), 1)
    if k > 1:
        # dim divides 128 here, so dim is a power of two: use shift/and.
        j = jnp.bitwise_and(col, dim - 1)          # col % dim
        grp = col >> (dim.bit_length() - 1)        # col // dim
    else:
        j = col
    # cos(x) == sin(x + pi/2): pi/2 phase on the second half of each dim group.
    phase = jnp.where(j >= half_dim, jnp.float32(_HALF_PI), jnp.float32(0.0))

    t = time_ref[...]                               # (TB, k)
    if k == 1:
        t_lanes = t                                 # (TB, 1), lane-broadcasts below
    else:
        # Expand each packed timestep across its dim-wide lane group with exact
        # f32 VPU selects (k <= 32, unrolled at trace time; VPU has slack).
        t_lanes = jnp.where(grp == 0, t[:, 0:1], jnp.float32(0.0))
        for g in range(1, k):
            t_lanes = jnp.where(grp == g, t[:, g:g + 1], t_lanes)

    angle = t_lanes * freq_ref[...]                 # (TB, width), exact f32 VPU
    # Cody-Waite range reduction to ~[-pi, pi] before the EUP sin; the phase is
    # added after reduction so its rounding error stays at the ~1e-7 level.
    n = jnp.floor(angle * _INV_2PI + 0.5)
    r = angle - n * _2PI_P1
    r = r - n * _2PI_P2
    r = r - n * _2PI_P3
    out_ref[...] = jnp.sin(r + phase).astype(out_ref.dtype)   # single full-width store


def sinusoidal_position_embeddings(time: jax.Array, dim: int,
                                   *, out_dtype=jnp.float32) -> jax.Array:
    """Pallas equivalent of SinusoidalPositionEmbeddings(dim)(time); time: (B,)."""
    assert time.ndim == 1, "time is expected to be a 1-D tensor of timesteps"
    assert dim % 2 == 0, "dim must be even"
    half_dim = dim // 2
    assert half_dim >= 2, "dim must be >= 4 (log(10000)/(half_dim-1) divides by zero)"

    b = time.shape[0]
    scale = math.log(10000.0) / (half_dim - 1)

    # Lane packing: fold k = 128 // dim batch rows into the lane axis when the
    # embedding is narrower than a vreg (only when dim divides 128).
    k = 128 // dim if (dim < 128 and 128 % dim == 0) else 1
    width = k * dim

    # Frequency row: identical XLA expression to the reference (bit-exact
    # freqs), duplicated for the sin/cos halves and tiled across lane groups.
    # This is the only table input (tiny); the phase is generated in-kernel.
    freqs = jnp.exp(jnp.arange(half_dim, dtype=jnp.float32) * -scale)
    freq_row = jnp.tile(jnp.concatenate([freqs, freqs]), (k,)).reshape(1, width)

    # Pack timesteps: kernel row r carries time[r*k : (r+1)*k]; padded tail
    # rows (garbage fed through sin, harmless) are dropped after the call.
    tf = time.astype(jnp.float32)
    pad = (-b) % k
    if pad:
        tf = jnp.pad(tf, (0, pad))
    rows = (b + pad) // k
    t_in = tf.reshape(rows, k)

    # Batch tiling: ~8 MiB output blocks amortize per-grid-step overhead and
    # push the store DMA toward the HBM roofline; for outputs > 4 MiB force
    # >= 2 grid steps so "parallel" can shard across both v7x TensorCores.
    itemsize = jnp.dtype(out_dtype).itemsize
    sub = max(8, 32 // itemsize)                 # sublane multiple: 8 f32 / 16 bf16 / 32 i8
    bytes_per_row = width * itemsize
    total_bytes = rows * bytes_per_row
    cap_rows = max(sub, (8 * 1024 * 1024 // max(bytes_per_row, 1)) // sub * sub)
    if total_bytes > 4 * 1024 * 1024 and rows >= 2 * sub:
        half_rows = -(-((rows + 1) // 2) // sub) * sub
        cap_rows = min(cap_rows, half_rows)
    tb = rows if rows <= cap_rows else cap_rows   # tail block masked by Pallas if ragged
    grid = (pl.cdiv(rows, tb),)

    kernel = functools.partial(_sinusoidal_kernel, dim=dim, half_dim=half_dim,
                               k=k, width=width)
    out = pl.pallas_call(
        kernel,
        out_shape=jax.ShapeDtypeStruct((rows, width), out_dtype),
        grid=grid,
        in_specs=[
            pl.BlockSpec((tb, k), lambda i: (i, 0)),       # packed timesteps
            pl.BlockSpec((1, width), lambda i: (0, 0)),    # constant freq row (tiny)
        ],
        out_specs=pl.BlockSpec((tb, width), lambda i: (i, 0)),
        compiler_params=pltpu.CompilerParams(
            dimension_semantics=("parallel",),             # megacore-shard batch (v7x)
            vmem_limit_bytes=32 * 1024 * 1024,             # 2 x 8 MiB out blocks + inputs
        ),
    )(t_in, freq_row)

    if k > 1:
        out = out.reshape(rows * k, dim)                   # free row-major view
        if rows * k != b:
            out = out[:b]
    return out


def _reference(time: jax.Array, dim: int) -> jax.Array:
    half_dim = dim // 2
    emb_scale = math.log(10000.0) / (half_dim - 1)
    freqs = jnp.exp(jnp.arange(half_dim, dtype=jnp.float32) * -emb_scale)
    ang = time.astype(jnp.float32)[:, None] * freqs[None, :]
    return jnp.concatenate([jnp.sin(ang), jnp.cos(ang)], axis=-1)


if __name__ == "__main__":
    key = jax.random.PRNGKey(0)

    # Diffusion timesteps in [0, 1000).  dim=128 exercises the lane-dense k=1
    # path, dim=32/64 the packed (k=4 / k=2) path, batch=10 the padded tail,
    # and one bf16 case the narrow-output dtype path.
    configs = [
        (8, 128, jnp.float32, 1e-4),
        (10, 32, jnp.float32, 1e-4),
        (16, 64, jnp.float32, 1e-4),
        (8, 128, jnp.bfloat16, 4e-3),
    ]
    for batch, dim, dt, tol in configs:
        kk = jax.random.fold_in(key, batch * 1000 + dim)
        time = jax.random.randint(kk, (batch,), 0, 1000).astype(jnp.float32)

        out = jax.block_until_ready(
            sinusoidal_position_embeddings(time, dim, out_dtype=dt))
        ref = _reference(time, dim)

        assert out.shape == (batch, dim), (out.shape, batch, dim)
        assert out.dtype == jnp.dtype(dt)
        max_err = float(jnp.max(jnp.abs(out.astype(jnp.float32) - ref)))
        assert max_err < tol, f"max abs err {max_err} (batch={batch}, dim={dim}, dtype={dt})"

    print("KERNEL_OK")
</pallas_src>

<mosaic_0001>
module attributes {stable_mosaic.version = 11 : i64} {
  func.func @_sinusoidal_kernel(%arg0: i32, %arg1: memref<8x1xf32, #tpu.memory_space<vmem>>, %arg2: memref<1x128xf32, #tpu.memory_space<vmem>>, %arg3: memref<8x128xf32, #tpu.memory_space<vmem>>) attributes {dimension_semantics = [#tpu.dimension_semantics<parallel>], iteration_bounds = array<i64: 1>, scalar_prefetch = 0 : i64, scratch_operands = 0 : i64, tpu.core_type = #tpu.core_type<tc>, window_params = [{transform_indices = @transform_0, window_bounds = array<i64: 8, 1>}, {pipeline_mode = #tpu.pipeline_mode<synchronous>, transform_indices = @transform_1, window_bounds = array<i64: 1, 128>}, {transform_indices = @transform_2, window_bounds = array<i64: 8, 128>}]} {
    %0 = tpu.iota {dimensions = array<i32: 1>} : vector<1x128xi32>
    %c64_i32 = arith.constant 64 : i32
    %1 = vector.broadcast %c64_i32 : i32 to vector<1x128xi32>
    %2 = arith.cmpi sge, %0, %1 : vector<1x128xi32>
    %cst = arith.constant 1.57079637 : f32
    %cst_0 = arith.constant 0.000000e+00 : f32
    %3 = vector.broadcast %cst : f32 to vector<1x128xf32>
    %4 = vector.broadcast %cst_0 : f32 to vector<1x128xf32>
    %5 = arith.select %2, %3, %4 : vector<1x128xi1>, vector<1x128xf32>
    %c0 = arith.constant 0 : index
    %c0_1 = arith.constant 0 : index
    %6 = vector.load %arg1[%c0, %c0_1] : memref<8x1xf32, #tpu.memory_space<vmem>>, vector<8x1xf32>
    %c0_2 = arith.constant 0 : index
    %c0_3 = arith.constant 0 : index
    %7 = vector.load %arg2[%c0_2, %c0_3] : memref<1x128xf32, #tpu.memory_space<vmem>>, vector<1x128xf32>
    %8 = vector.broadcast %6 : vector<8x1xf32> to vector<8x128xf32>
    %9 = vector.broadcast %7 : vector<1x128xf32> to vector<8x128xf32>
    %10 = arith.mulf %8, %9 : vector<8x128xf32>
    %cst_4 = arith.constant 0.159154937 : f32
    %11 = vector.broadcast %cst_4 : f32 to vector<8x128xf32>
    %12 = arith.mulf %10, %11 : vector<8x128xf32>
    %cst_5 = arith.constant 5.000000e-01 : f32
    %13 = vector.broadcast %cst_5 : f32 to vector<8x128xf32>
    %14 = arith.addf %12, %13 : vector<8x128xf32>
    %15 = math.floor %14 : vector<8x128xf32>
    %cst_6 = arith.constant 6.281250e+00 : f32
    %16 = vector.broadcast %cst_6 : f32 to vector<8x128xf32>
    %17 = arith.mulf %15, %16 : vector<8x128xf32>
    %18 = arith.subf %10, %17 : vector<8x128xf32>
    %cst_7 = arith.constant 0.00193500519 : f32
    %19 = vector.broadcast %cst_7 : f32 to vector<8x128xf32>
    %20 = arith.mulf %15, %19 : vector<8x128xf32>
    %21 = arith.subf %18, %20 : vector<8x128xf32>
    %cst_8 = arith.constant 3.01991605E-7 : f32
    %22 = vector.broadcast %cst_8 : f32 to vector<8x128xf32>
    %23 = arith.mulf %15, %22 : vector<8x128xf32>
    %24 = arith.subf %21, %23 : vector<8x128xf32>
    %25 = vector.broadcast %5 : vector<1x128xf32> to vector<8x128xf32>
    %26 = arith.addf %24, %25 : vector<8x128xf32>
    %27 = math.sin %26 : vector<8x128xf32>
    %c0_9 = arith.constant 0 : index
    %c0_10 = arith.constant 0 : index
    %28 = vector.load %arg3[%c0_9, %c0_10] : memref<8x128xf32, #tpu.memory_space<vmem>>, vector<8x128xf32>
    tpu.vector_store %arg3[%c0_9, %c0_10], %27 {strides = array<i32>} : memref<8x128xf32, #tpu.memory_space<vmem>>, vector<8x128xf32>,
    return
  }
  func.func @transform_0(%arg0: i32) -> (i32, i32) {
    %c0_i32 = arith.constant 0 : i32
    %c0_i32_0 = arith.constant 0 : i32
    return %arg0, %c0_i32 : i32, i32
  }
  func.func @transform_1(%arg0: i32) -> (i32, i32) {
    %c0_i32 = arith.constant 0 : i32
    %c0_i32_0 = arith.constant 0 : i32
    %c0_i32_1 = arith.constant 0 : i32
    return %c0_i32, %c0_i32_0 : i32, i32
  }
  func.func @transform_2(%arg0: i32) -> (i32, i32) {
    %c0_i32 = arith.constant 0 : i32
    %c0_i32_0 = arith.constant 0 : i32
    return %arg0, %c0_i32 : i32, i32
  }
}

</mosaic_0001>

<llo_original>
// kernel: tpu_custom_call.1
$region0: #{tpu_custom_call.1}
  #allocation0 [shape = 'u32[]', space=smem, size = 0x4, offset = 0x4, fixed_abs, tag = 'smem constant byte address 0x4 - core index']
  #allocation1 [shape = 'u32[144,128]{1,0:T(1,128)}', space=vmem, size = 0x12000, scoped, tag = 'internal scratch']
  %s0 = inlined_call_operand.vmem [shape: f32[8,1], index: 0, kind: input, shape index: {}]
  %s1 = inlined_call_operand.vmem [shape: f32[1,128], index: 1, kind: input, shape index: {}]
  %s2 = inlined_call_operand.hbm [shape: f32[8,128], index: 2, kind: output, shape index: {}]
  %s3 = sld [smem:[#allocation0]]
  $region18: #{tpu_custom_call.1} parent=0
    _
  %s5 = ssub.s32 1, %s3
  %s6 = scalar_select 0, %s5, %s3
  $region1: #{tpu_custom_call.1} parent=0
    #allocation2 [shape = 'u8[4096]{0}', space=vmem, size = 0x1000, scoped, tag = 'output window, operand 0, single buffered']
    #allocation3 [shape = 's32[1]{0}', space=sflag, size = 0x4, scoped, tag = 'scoped memory for tpu_custom_call.1']
    %7 = vsyncpa [#allocation3], 0
    // Predicated region
    $region2: #{tpu_custom_call.1} parent=1 // pred_check
      _
    $region3: #{tpu_custom_call.1} parent=1 // pred_check_branch
      %9 = sbr.rel (0) target = $region5
    $region4: #{tpu_custom_call.1} parent=1 // pred_region
      _
    $region5: #{tpu_custom_call.1} parent=1 // pred_fallthru
      _
    // Predicated region
    $region6: #{tpu_custom_call.1} parent=1 // pred_check
      _
    $region7: #{tpu_custom_call.1} parent=1 // pred_check_branch
      %11 = sbr.rel (0) target = $region9
    $region8: #{tpu_custom_call.1} parent=1 // pred_region
      _
    $region9: #{tpu_custom_call.1} parent=1 // pred_fallthru
      _
    %v12 = vlaneseq
    %v13 = vand.u32 %v12, 127
    %vm14 = vcmp.ge.s32.totalorder %v13, 64
    %v15 = vsel %vm14, 1.5707964, 0.0
    %v16 = vld [vmem:[%s0] sm:$0xff]
    %v17 = vld [vmem:[%s1] sm:$0x1]
    %19 = vset.pattern.permute.xlu0 0
    %20 = vperm.xlu0 %19, %v16
    %v21 = vpop.permute.xlu0 %20
    %v24 = vlaneseq
    %v25 = vshrl.u32 %v24, 7
    %v26 = vsub.s32 0, %v25
    %v27 = vrot.slane %v17, %v26
    %v29 = vmul.f32 %v21, %v27
    %v30 = vmul.f32 %v29, 0.15915494
    %v31 = vadd.f32 %v30, 0.5
    %v32 = vfloor.f32 %v31
    %v33 = vmul.f32 %v32, 6.28125
    %v34 = vsub.f32 %v29, %v33
    %v35 = vmul.f32 %v32, 0.0019350052
    %v36 = vsub.f32 %v34, %v35
    %v37 = vmul.f32 %v32, 3.019916e-07
    %v38 = vsub.f32 %v36, %v37
    %v39 = vadd.f32 %v38, %v15
    %v40 = vand.u32 2147483647, %v39
    %vm41 = vcmp.le.f32.partialorder %v40, 0.7853982
    %vm42 = vcmp.lt.s32.totalorder %v39, 0
    %v43 = vand.u32 %v39, 2139095040
    %v44 = vshrl.u32 %v43, 23
    %v45 = vsub.s32 %v44, 127
    %v46 = vand.u32 2147483647, %v39
    %v47 = vand.u32 %v46, 8388607
    %v48 = vor.u32 %v47, 8388608
    %v49 = vsub.s32 0, %v48
    %v50 = vadd.s32 %v45, 1
    %vm51 = vcmp.gt.s32.totalorder %v50, 0
    %v52 = vsel %vm51, %v50, 0
    %v53 = vshrl.u32 %v52, 5
    %v54 = vand.u32 %v52, 31
    %v55 = vsub.s32 32, %v54
    %v56 = vshrl.u32 683565275, %v55
    %v57 = vshll.u32 683565275, %v54
    %v58 = vshrl.u32 2475754826, %v55
    %v59 = vor.u32 %v57, %v58
    %v60 = vshll.u32 2475754826, %v54
    %v61 = vshrl.u32 2131351028, %v55
    %v62 = vor.u32 %v60, %v61
    %v63 = vshll.u32 2131351028, %v54
    %v64 = vshrl.u32 2102212464, %v55
    %v65 = vor.u32 %v63, %v64
    %v66 = vshll.u32 2102212464, %v54
    %v67 = vshrl.u32 920167782, %v55
    %v68 = vor.u32 %v66, %v67
    %v69 = vshll.u32 920167782, %v54
    %v70 = vshrl.u32 1326507024, %v55
    %v71 = vor.u32 %v69, %v70
    %vm72 = vcmp.lt.s32.totalorder %v53, 1
    %vm73 = vcmp.lt.s32.totalorder %v53, 2
    %vm74 = vcmp.lt.s32.totalorder %v53, 3
    %vm75 = vcmp.lt.s32.totalorder %v53, 4
    %v76 = vsel %vm72, %v56, %v59
    %v77 = vsel %vm75, %v65, 2102212464
    %v78 = vsel %vm74, %v62, %v77
    %v79 = vsel %vm73, %v76, %v78
    %v80 = vsel %vm72, %v59, %v62
    %v81 = vsel %vm75, %v68, 920167782
    %v82 = vsel %vm74, %v65, %v81
    %v83 = vsel %vm73, %v80, %v82
    %v84 = vsel %vm72, %v62, %v65
    %v85 = vsel %vm75, %v71, 1326507024
    %v86 = vsel %vm74, %v68, %v85
    %v87 = vsel %vm73, %v84, %v86
    %v88 = vshll.u32 %v48, 8
    %v89 = vmul.u32.u64.compose %v88, %v87
    %v90 = vextract.low.u32 %v89
    %v91 = vextract.high.u32 %v89
    %v92 = vmul.u32.u64.compose %v88, %v83
    %v93 = vextract.low.u32 %v92
    %v94 = vextract.high.u32 %v92
    %v95 = vmul.u32 %v88, %v79
    %v96 = vadd.s32 %v91, %v93
    %vm97 = vc.u32 %v91, %v93
    %v98 = vadd.s32 %v94, 1
    %v99 = vsel %vm97, %v98, %v94
    %v100 = vadd.s32 %v95, %v99
    %v101 = vadd.s32 %v100, 536870912
    %v102 = vshrl.u32 %v101, 30
    %v103 = vshll.u32 %v102, 30
    %v104 = vsub.s32 %v100, %v103
    %vm105 = vcmp.lt.s32.totalorder %v104, 0
    %v106 = vsub.s32 0, %v104
    %v107 = vsel %vm105, %v106, %v104
    %v108 = vclz %v107
    %v109 = vsub.s32 %v108, 2
    %vm110 = vcmp.gt.s32.totalorder 0, %v109
    %v111 = vsel %vm110, 0, %v109
    %v112 = vsub.s32 32, %v111
    %v113 = vshll.u32 %v104, %v111
    %v114 = vshrl.u32 %v96, %v112
    %v115 = vor.u32 %v113, %v114
    %v116 = vsub.s32 4294967266, %v111
    %v117 = vadd.s32 %v116, 127
    %v118 = vshll.u32 %v117, 23
    %v119 = vor.u32 4788187, %v118
    %v120 = vand.u32 2147483647, %v119
    %v122 = vcvt.s32.f32 %v115
    %v123 = vmul.f32 %v122, %v120
    %v124 = vxor.u32 %v123, 2147483648
    %v125 = vsel %vm42, %v124, %v123
    %v126 = vsub.s32 4, %v102
    %v127 = vsel %vm42, %v126, %v102
    %v128 = vsel %vm41, %v39, %v125
    %v129 = vsel %vm41, 0, %v127
    %v130 = vcosq.f32.pop %v128
    %v131 = vsinq.f32.pop %v128
    %vm132 = vweird.f32 %v39
    %v133 = vadd.s32 %v129, 3
    %v134 = vand.u32 %v133, 3
    %vm135 = vcmp.lt.s32.totalorder %v134, 2
    %vm136 = vcmp.eq.s32.totalorder %v134, 0
    %v137 = vxor.u32 %v131, 2147483648
    %v138 = vsel %vm136, %v130, %v137
    %vm139 = vcmp.eq.s32.totalorder %v134, 2
    %v140 = vxor.u32 %v130, 2147483648
    %v141 = vsel %vm139, %v140, %v131
    %v142 = vsel %vm135, %v138, %v141
    %v143 = vsel %vm132, nan, %v142
    %144 = vst [vmem:[#allocation2] sm:$0xff] %v143
    // Predicated region
    $region10: #{tpu_custom_call.1} parent=1 // pred_check
      _
    $region11: #{tpu_custom_call.1} parent=1 // pred_check_branch
      %146 = sbr.rel (0) target = $region13
    $region12: #{tpu_custom_call.1} parent=1 // pred_region
      %s148 = ssub.s32 128, 128
      %149 = vsyncadd [#allocation3], %s148
      %s151 = sshll.u32 [#allocation2], 4
      %s152 = int_to_ptr.vmem [resolvable:$true] %s151
      %154 = dma.vmem_to_hbm [thread:$0]  %s152, 128, %s2, [#allocation3]
    $region13: #{tpu_custom_call.1} parent=1 // pred_fallthru
      _
    // Predicated region
    $region14: #{tpu_custom_call.1} parent=1 // pred_check
      _
    $region15: #{tpu_custom_call.1} parent=1 // pred_check_branch
      %156 = sbr.rel (0) target = $region17
    $region16: #{tpu_custom_call.1} parent=1 // pred_region
      %157 = dma.done [#allocation3], 128
    $region17: #{tpu_custom_call.1} parent=1 // pred_fallthru
      _
    %158 = vsyncpa [#allocation3], 1

</llo_original>
